<compile_context>
chip_gen: v6e
topology: v6e:2x2x1
jax: 0.10.0
libtpu: 0.0.40
codegen_flags: <defaults>
</compile_context>

<pallas_src>
import math

import jax
import jax.numpy as jnp
from jax.experimental import pallas as pl
from jax.experimental.pallas import tpu as pltpu

TWO_PI = 2.0 * math.pi


def _round_up(x, m):
    return (x + m - 1) // m * m


def _cdiv(a, b):
    return (a + b - 1) // b


def _choose_tile(m, nb, d, row_tile):
    """Rows (positions) handled per grid step.

    Multiple of 128 (lane-dense input block / sublane-aligned output block)
    unless a single full-array block covers everything (m <= 128).  Targets
    >= ~1 MiB of output per step to amortize the ~0.35us per-step pipeline
    overhead, stays within a ~20 MiB/step VMEM budget (v7x has only 64 MiB
    physical VMEM), and keeps >=2 (ideally >=4) grid steps so the "parallel"
    axis can shard across both TensorCores on v7x.
    """
    mp0 = _round_up(m, 128)
    # Per-row VMEM bytes: double-buffered out + double-buffered in + ~6 f32
    # (nb, tile)-sized temporaries (angle, sin, cos, transposes).
    per_row = (2 * (2 * nb) + 2 * d + 6 * nb) * 4
    budget_rows = max(128, ((20 << 20) // per_row) // 128 * 128)
    # >= ~1 MiB of output per step.
    min_rows = max(128, _round_up((1 << 20) // (2 * nb * 4), 128))
    tile = _round_up(max(int(row_tile), min_rows), 128)
    tile = min(tile, budget_rows)
    # Megacore / pipeline overlap: prefer >=4 steps for medium+ problems,
    # >=2 whenever there is more than one 128-row chunk of work.
    if mp0 >= 4096:
        target_steps = 4
    elif mp0 >= 256:
        target_steps = 2
    else:
        target_steps = 1
    tile = min(tile, _round_up(_cdiv(mp0, target_steps), 128))
    return max(tile, 128)


def _make_ff_kernel(nb, d):
    def kernel(v_ref, b_ref, o_ref):
        # v_ref: (d, tile)      f32  positions are lane-dense
        # b_ref: (nb, d)        f32  raw bands / projection matrix
        # o_ref: (tile, 2*nb)        torch layout [sin_0..sin_{nb-1}, cos_0..cos_{nb-1}]
        #
        # proj = B @ v as an unrolled VPU broadcast multiply-add (d is tiny;
        # a (tile,1)x(1,nb) MXU product would only add push/pop latency).
        proj = b_ref[:, 0:1] * v_ref[0:1, :]
        for k in range(1, d):
            proj = proj + b_ref[:, k:k + 1] * v_ref[k:k + 1, :]
        # Multiply by 2*pi HERE (not pre-folded into the bands) so the angle
        # matches the reference's rounding order bit-for-bit.
        ang = proj * TWO_PI
        # Lane-dense sin/cos on (nb, tile); transpose on the idle XLU so the
        # stored block is already in (positions, features) layout and the
        # wrapper needs no extra HBM transpose pass.
        o_ref[:, :nb] = jnp.sin(ang).T.astype(o_ref.dtype)
        o_ref[:, nb:] = jnp.cos(ang).T.astype(o_ref.dtype)

    return kernel


def _fourier_features_common(v_cols, bands, row_tile, out_dtype):
    """Core pallas_call.

    v_cols: (d, M) f32 (already normalized for logspace mode)
    bands:  (nb, d) f32 (raw; 2*pi applied inside the kernel)
    returns (M, 2*nb) in torch layout (sin block then cos block).
    """
    d, m = v_cols.shape
    nb = bands.shape[0]

    tile = _choose_tile(m, nb, d, row_tile)
    if tile >= m:
        # Single block covering everything: block shapes == full array dims,
        # so no (8,128) constraint, no padding, no masking.  (Only hit for
        # m <= 128.)
        tile = m
        grid_n = 1
    else:
        grid_n = _cdiv(m, tile)

    m_in = grid_n * tile
    if m_in != m:
        # Cheap input pad (input traffic is ~1/(2*nb) of output traffic) so
        # every input block read is fully in-bounds; the ragged last OUTPUT
        # block is write-masked by Pallas, so no post-kernel slice/copy.
        v_cols = jnp.pad(v_cols, ((0, 0), (0, m_in - m)))

    out_row_bytes = 2 * nb * jnp.dtype(out_dtype).itemsize
    # Double-buffered in/out pipeline buffers + headroom for in-kernel temps.
    vmem_limit = 2 * (d * tile * 4 + tile * out_row_bytes) + 8 * nb * tile * 4 + (4 << 20)
    vmem_limit = int(min(max(vmem_limit, 16 << 20), 48 << 20))

    out = pl.pallas_call(
        _make_ff_kernel(nb, d),
        out_shape=jax.ShapeDtypeStruct((m, 2 * nb), out_dtype),
        grid=(grid_n,),
        in_specs=[
            pl.BlockSpec((d, tile), lambda i: (0, i)),
            pl.BlockSpec((nb, d), lambda i: (0, 0)),
        ],
        out_specs=pl.BlockSpec((tile, 2 * nb), lambda i: (i, 0)),
        compiler_params=pltpu.CompilerParams(
            dimension_semantics=("parallel",),
            vmem_limit_bytes=vmem_limit,
        ),
        cost_estimate=pl.CostEstimate(
            flops=int(m * nb * (2 * d + 1)),
            transcendentals=int(2 * m * nb),
            bytes_accessed=int(4 * d * m + out_row_bytes * m),
        ),
    )(v_cols.astype(jnp.float32), bands.astype(jnp.float32))
    return out


# ----------------------------------------------------------------------------
# logspace mode: v_freq = (v / max_val)[..., None] * bands ; out = [sin, cos]
# ----------------------------------------------------------------------------
def fourier_features_logspace(v_grid, bands, max_val=1.4, row_tile=16384,
                              out_dtype=jnp.float32):
    lead_shape = v_grid.shape
    nb = bands.shape[0]
    # Same op & rounding order as the reference / torch module.
    v_norm = v_grid.astype(jnp.float32) / max_val
    v_cols = v_norm.reshape(1, -1)                         # (1, M), free reshape
    b = bands.astype(jnp.float32).reshape(nb, 1)
    out2d = _fourier_features_common(v_cols, b, row_tile, out_dtype)
    return out2d.reshape(*lead_shape, 2 * nb)              # free reshape


# ----------------------------------------------------------------------------
# gaussian mode: v_proj = v @ B.T ; out = [sin(2*pi*v_proj), cos(2*pi*v_proj)]
# ----------------------------------------------------------------------------
def fourier_features_gaussian(v_grid, B, input_dim=1, row_tile=16384,
                              out_dtype=jnp.float32):
    # Mirrors torch: if 2-D input and input_dim == 1, unsqueeze last dim.
    if v_grid.ndim == 2 and input_dim == 1:
        v = v_grid[..., None]
    else:
        v = v_grid
    lead_shape = v.shape[:-1]
    nb = B.shape[0]
    v_cols = v.reshape(-1, input_dim).T.astype(jnp.float32)  # (d, M); tiny transpose
    b = B.astype(jnp.float32).reshape(nb, input_dim)
    out2d = _fourier_features_common(v_cols, b, row_tile, out_dtype)
    return out2d.reshape(*lead_shape, 2 * nb)               # free reshape


# ----------------------------------------------------------------------------
# Pure-JAX references (match torch semantics)
# ----------------------------------------------------------------------------
def _ref_logspace(v_grid, bands, max_val):
    v_norm = (v_grid / max_val)[..., None]
    v_freq = v_norm * bands
    return jnp.concatenate(
        [jnp.sin(TWO_PI * v_freq), jnp.cos(TWO_PI * v_freq)], axis=-1
    )


def _ref_gaussian(v_grid, B, input_dim=1):
    if v_grid.ndim == 2 and input_dim == 1:
        v = v_grid[..., None]
    else:
        v = v_grid
    # HIGHEST keeps the reference in full f32 (faithful to torch.matmul)
    # instead of the TPU default low-precision matmul passes.
    v_proj = jnp.matmul(v, B.T, precision=jax.lax.Precision.HIGHEST)
    return jnp.concatenate(
        [jnp.sin(TWO_PI * v_proj), jnp.cos(TWO_PI * v_proj)], axis=-1
    )


if __name__ == "__main__":
    key = jax.random.PRNGKey(0)
    k_v, k_b, k_v3, k_b3 = jax.random.split(key, 4)

    batch, seq = 2, 16
    num_bands = 16
    max_val = 1.4
    sigma = 10.0

    v_grid = jax.random.uniform(
        k_v, (batch, seq), dtype=jnp.float32, minval=0.0, maxval=max_val
    )
    bands_logspace = jnp.logspace(0.0, 3.0, num_bands, dtype=jnp.float32)
    B_gauss = jax.random.normal(k_b, (num_bands, 1), dtype=jnp.float32) * sigma

    # logspace mode.  Angles reach ~2*pi*1e3 ~ 6.3e3 rad; one f32 ULP of the
    # argument is ~7.6e-4, so allow a few ULP of argument error between the
    # kernel's and XLA's sin/cos of the same f32 angle.
    out_log = jax.block_until_ready(
        fourier_features_logspace(v_grid, bands_logspace, max_val=max_val))
    ref_log = _ref_logspace(v_grid, bands_logspace, max_val)
    assert out_log.shape == (batch, seq, 2 * num_bands)
    assert jnp.allclose(out_log, ref_log, atol=2e-3, rtol=1e-3)

    # gaussian mode, input_dim = 1 (angles only reach a few hundred rad).
    out_g = jax.block_until_ready(fourier_features_gaussian(v_grid, B_gauss, input_dim=1))
    ref_g = _ref_gaussian(v_grid, B_gauss, input_dim=1)
    assert out_g.shape == (batch, seq, 2 * num_bands)
    assert jnp.allclose(out_g, ref_g, atol=1e-3, rtol=1e-3)

    # gaussian mode, input_dim = 3 (exercises the unrolled VPU accumulation).
    input_dim3 = 3
    v_grid3 = jax.random.uniform(
        k_v3, (batch, seq, input_dim3), dtype=jnp.float32, minval=0.0, maxval=max_val
    )
    B_gauss3 = jax.random.normal(
        k_b3, (num_bands, input_dim3), dtype=jnp.float32
    ) * sigma
    out_g3 = jax.block_until_ready(
        fourier_features_gaussian(v_grid3, B_gauss3, input_dim=input_dim3))
    ref_g3 = _ref_gaussian(v_grid3, B_gauss3, input_dim=input_dim3)
    assert out_g3.shape == (batch, seq, 2 * num_bands)
    assert jnp.allclose(out_g3, ref_g3, atol=1e-3, rtol=1e-3)

    print("KERNEL_OK")
</pallas_src>

<mosaic_0001>
module attributes {stable_mosaic.version = 11 : i64} {
  func.func @kernel(%arg0: i32, %arg1: memref<1x32xf32, #tpu.memory_space<vmem>>, %arg2: memref<16x1xf32, #tpu.memory_space<vmem>>, %arg3: memref<32x32xf32, #tpu.memory_space<vmem>>) attributes {dimension_semantics = [#tpu.dimension_semantics<parallel>], iteration_bounds = array<i64: 1>, scalar_prefetch = 0 : i64, scratch_operands = 0 : i64, tpu.core_type = #tpu.core_type<tc>, window_params = [{transform_indices = @transform_0, window_bounds = array<i64: 1, 32>}, {pipeline_mode = #tpu.pipeline_mode<synchronous>, transform_indices = @transform_1, window_bounds = array<i64: 16, 1>}, {transform_indices = @transform_2, window_bounds = array<i64: 32, 32>}]} {
    %c0 = arith.constant 0 : index
    %c0_0 = arith.constant 0 : index
    %0 = vector.load %arg2[%c0, %c0_0] : memref<16x1xf32, #tpu.memory_space<vmem>>, vector<16x1xf32>
    %c0_1 = arith.constant 0 : index
    %c0_2 = arith.constant 0 : index
    %1 = vector.load %arg1[%c0_1, %c0_2] : memref<1x32xf32, #tpu.memory_space<vmem>>, vector<1x32xf32>
    %2 = vector.broadcast %0 : vector<16x1xf32> to vector<16x32xf32>
    %3 = vector.broadcast %1 : vector<1x32xf32> to vector<16x32xf32>
    %4 = arith.mulf %2, %3 : vector<16x32xf32>
    %cst = arith.constant 6.28318548 : f32
    %5 = vector.broadcast %cst : f32 to vector<16x32xf32>
    %6 = arith.mulf %4, %5 : vector<16x32xf32>
    %7 = math.sin %6 : vector<16x32xf32>
    %8 = tpu.transpose %7, [1, 0] : vector<16x32xf32> -> vector<32x16xf32>
    %c0_3 = arith.constant 0 : index
    %c0_4 = arith.constant 0 : index
    %9 = vector.load %arg3[%c0_3, %c0_4] : memref<32x32xf32, #tpu.memory_space<vmem>>, vector<32x16xf32>
    tpu.vector_store %arg3[%c0_3, %c0_4], %8 {strides = array<i32>} : memref<32x32xf32, #tpu.memory_space<vmem>>, vector<32x16xf32>,
    %10 = math.cos %6 : vector<16x32xf32>
    %11 = tpu.transpose %10, [1, 0] : vector<16x32xf32> -> vector<32x16xf32>
    %c0_5 = arith.constant 0 : index
    %c16 = arith.constant 16 : index
    %12 = vector.load %arg3[%c0_5, %c16] : memref<32x32xf32, #tpu.memory_space<vmem>>, vector<32x16xf32>
    tpu.vector_store %arg3[%c0_5, %c16], %11 {strides = array<i32>} : memref<32x32xf32, #tpu.memory_space<vmem>>, vector<32x16xf32>,
    return
  }
  func.func @transform_0(%arg0: i32) -> (i32, i32) {
    %c0_i32 = arith.constant 0 : i32
    %c0_i32_0 = arith.constant 0 : i32
    return %c0_i32, %arg0 : i32, i32
  }
  func.func @transform_1(%arg0: i32) -> (i32, i32) {
    %c0_i32 = arith.constant 0 : i32
    %c0_i32_0 = arith.constant 0 : i32
    %c0_i32_1 = arith.constant 0 : i32
    return %c0_i32, %c0_i32_0 : i32, i32
  }
  func.func @transform_2(%arg0: i32) -> (i32, i32) {
    %c0_i32 = arith.constant 0 : i32
    %c0_i32_0 = arith.constant 0 : i32
    return %arg0, %c0_i32 : i32, i32
  }
}

</mosaic_0001>

<llo_original>
// kernel: tpu_custom_call.1
$region0: #{tpu_custom_call.1}
  #allocation0 [shape = 'u32[]', space=smem, size = 0x4, offset = 0x4, fixed_abs, tag = 'smem constant byte address 0x4 - core index']
  #allocation1 [shape = 'u32[144,128]{1,0:T(1,128)}', space=vmem, size = 0x12000, scoped, tag = 'internal scratch']
  %s0 = inlined_call_operand.vmem [shape: f32[1,32], index: 0, kind: input, shape index: {}]
  %s1 = inlined_call_operand.vmem [shape: f32[16,1], index: 1, kind: input, shape index: {}]
  %s2 = inlined_call_operand.hbm [shape: f32[32,32], index: 2, kind: output, shape index: {}]
  %s3 = sld [smem:[#allocation0]]
  $region18: #{tpu_custom_call.1} parent=0
    _
  %s5 = ssub.s32 1, %s3
  %s6 = scalar_select 0, %s5, %s3
  $region1: #{tpu_custom_call.1} parent=0
    #allocation2 [shape = 'u8[16384]{0}', space=vmem, size = 0x4000, scoped, tag = 'output window, operand 0, single buffered']
    #allocation3 [shape = 's32[1]{0}', space=sflag, size = 0x4, scoped, tag = 'scoped memory for tpu_custom_call.1']
    %7 = vsyncpa [#allocation3], 0
    // Predicated region
    $region2: #{tpu_custom_call.1} parent=1 // pred_check
      _
    $region3: #{tpu_custom_call.1} parent=1 // pred_check_branch
      %9 = sbr.rel (0) target = $region5
    $region4: #{tpu_custom_call.1} parent=1 // pred_region
      _
    $region5: #{tpu_custom_call.1} parent=1 // pred_fallthru
      _
    // Predicated region
    $region6: #{tpu_custom_call.1} parent=1 // pred_check
      _
    $region7: #{tpu_custom_call.1} parent=1 // pred_check_branch
      %11 = sbr.rel (0) target = $region9
    $region8: #{tpu_custom_call.1} parent=1 // pred_region
      _
    $region9: #{tpu_custom_call.1} parent=1 // pred_fallthru
      _
    %v12 = vld [vmem:[%s1] sm:$0xff]
    %v13 = vld [vmem:[%s1 + $0x8] sm:$0xff]
    %v14 = vld [vmem:[%s0] sm:$0x1]
    %16 = vset.pattern.permute.xlu0 0
    %17 = vperm.xlu0 %16, %v12
    %v18 = vpop.permute.xlu0 %17
    %21 = vset.pattern.permute.xlu0 0
    %22 = vperm.xlu0 %21, %v13
    %v23 = vpop.permute.xlu0 %22
    %v26 = vlaneseq
    %v27 = vshrl.u32 %v26, 7
    %v28 = vsub.s32 0, %v27
    %v29 = vrot.slane %v14, %v28
    %v31 = vmul.f32 %v18, %v29
    %v32 = vmul.f32 %v23, %v29
    %v33 = vmul.f32 %v31, 6.2831855
    %v34 = vmul.f32 %v32, 6.2831855
    %v35 = vand.u32 2147483647, %v33
    %vm36 = vcmp.le.f32.partialorder %v35, 0.7853982
    %vm37 = vcmp.lt.s32.totalorder %v33, 0
    %v38 = vand.u32 %v33, 2139095040
    %v39 = vshrl.u32 %v38, 23
    %v40 = vsub.s32 %v39, 127
    %v41 = vand.u32 2147483647, %v33
    %v42 = vand.u32 %v41, 8388607
    %v43 = vor.u32 %v42, 8388608
    %v44 = vsub.s32 0, %v43
    %v45 = vadd.s32 %v40, 1
    %vm46 = vcmp.gt.s32.totalorder %v45, 0
    %v47 = vsel %vm46, %v45, 0
    %v48 = vshrl.u32 %v47, 5
    %v49 = vand.u32 %v47, 31
    %v50 = vsub.s32 32, %v49
    %v51 = vshrl.u32 683565275, %v50
    %v52 = vshll.u32 683565275, %v49
    %v53 = vshrl.u32 2475754826, %v50
    %v54 = vor.u32 %v52, %v53
    %v55 = vshll.u32 2475754826, %v49
    %v56 = vshrl.u32 2131351028, %v50
    %v57 = vor.u32 %v55, %v56
    %v58 = vshll.u32 2131351028, %v49
    %v59 = vshrl.u32 2102212464, %v50
    %v60 = vor.u32 %v58, %v59
    %v61 = vshll.u32 2102212464, %v49
    %v62 = vshrl.u32 920167782, %v50
    %v63 = vor.u32 %v61, %v62
    %v64 = vshll.u32 920167782, %v49
    %v65 = vshrl.u32 1326507024, %v50
    %v66 = vor.u32 %v64, %v65
    %vm67 = vcmp.lt.s32.totalorder %v48, 1
    %vm68 = vcmp.lt.s32.totalorder %v48, 2
    %vm69 = vcmp.lt.s32.totalorder %v48, 3
    %vm70 = vcmp.lt.s32.totalorder %v48, 4
    %v71 = vsel %vm67, %v51, %v54
    %v72 = vsel %vm70, %v60, 2102212464
    %v73 = vsel %vm69, %v57, %v72
    %v74 = vsel %vm68, %v71, %v73
    %v75 = vsel %vm67, %v54, %v57
    %v76 = vsel %vm70, %v63, 920167782
    %v77 = vsel %vm69, %v60, %v76
    %v78 = vsel %vm68, %v75, %v77
    %v79 = vsel %vm67, %v57, %v60
    %v80 = vsel %vm70, %v66, 1326507024
    %v81 = vsel %vm69, %v63, %v80
    %v82 = vsel %vm68, %v79, %v81
    %v83 = vshll.u32 %v43, 8
    %v84 = vmul.u32.u64.compose %v83, %v82
    %v85 = vextract.low.u32 %v84
    %v86 = vextract.high.u32 %v84
    %v87 = vmul.u32.u64.compose %v83, %v78
    %v88 = vextract.low.u32 %v87
    %v89 = vextract.high.u32 %v87
    %v90 = vmul.u32 %v83, %v74
    %v91 = vadd.s32 %v86, %v88
    %vm92 = vc.u32 %v86, %v88
    %v93 = vadd.s32 %v89, 1
    %v94 = vsel %vm92, %v93, %v89
    %v95 = vadd.s32 %v90, %v94
    %v96 = vadd.s32 %v95, 536870912
    %v97 = vshrl.u32 %v96, 30
    %v98 = vshll.u32 %v97, 30
    %v99 = vsub.s32 %v95, %v98
    %vm100 = vcmp.lt.s32.totalorder %v99, 0
    %v101 = vsub.s32 0, %v99
    %v102 = vsel %vm100, %v101, %v99
    %v103 = vclz %v102
    %v104 = vsub.s32 %v103, 2
    %vm105 = vcmp.gt.s32.totalorder 0, %v104
    %v106 = vsel %vm105, 0, %v104
    %v107 = vsub.s32 32, %v106
    %v108 = vshll.u32 %v99, %v106
    %v109 = vshrl.u32 %v91, %v107
    %v110 = vor.u32 %v108, %v109
    %v111 = vsub.s32 4294967266, %v106
    %v112 = vadd.s32 %v111, 127
    %v113 = vshll.u32 %v112, 23
    %v114 = vor.u32 4788187, %v113
    %v115 = vand.u32 2147483647, %v114
    %v117 = vcvt.s32.f32 %v110
    %v118 = vmul.f32 %v117, %v115
    %v119 = vxor.u32 %v118, 2147483648
    %v120 = vsel %vm37, %v119, %v118
    %v121 = vsub.s32 4, %v97
    %v122 = vsel %vm37, %v121, %v97
    %v123 = vsel %vm36, %v33, %v120
    %v124 = vsel %vm36, 0, %v122
    %v125 = vcosq.f32.pop %v123
    %v126 = vsinq.f32.pop %v123
    %vm127 = vweird.f32 %v33
    %v128 = vadd.s32 %v124, 3
    %v129 = vand.u32 %v128, 3
    %vm130 = vcmp.lt.s32.totalorder %v129, 2
    %vm131 = vcmp.eq.s32.totalorder %v129, 0
    %v132 = vxor.u32 %v126, 2147483648
    %v133 = vsel %vm131, %v125, %v132
    %vm134 = vcmp.eq.s32.totalorder %v129, 2
    %v135 = vxor.u32 %v125, 2147483648
    %v136 = vsel %vm134, %v135, %v126
    %v137 = vsel %vm130, %v133, %v136
    %v138 = vsel %vm127, nan, %v137
    %v139 = vand.u32 2147483647, %v34
    %vm140 = vcmp.le.f32.partialorder %v139, 0.7853982
    %vm141 = vcmp.lt.s32.totalorder %v34, 0
    %v142 = vand.u32 %v34, 2139095040
    %v143 = vshrl.u32 %v142, 23
    %v144 = vsub.s32 %v143, 127
    %v145 = vand.u32 2147483647, %v34
    %v146 = vand.u32 %v145, 8388607
    %v147 = vor.u32 %v146, 8388608
    %v148 = vsub.s32 0, %v147
    %v149 = vadd.s32 %v144, 1
    %vm150 = vcmp.gt.s32.totalorder %v149, 0
    %v151 = vsel %vm150, %v149, 0
    %v152 = vshrl.u32 %v151, 5
    %v153 = vand.u32 %v151, 31
    %v154 = vsub.s32 32, %v153
    %v155 = vshrl.u32 683565275, %v154
    %v156 = vshll.u32 683565275, %v153
    %v157 = vshrl.u32 2475754826, %v154
    %v158 = vor.u32 %v156, %v157
    %v159 = vshll.u32 2475754826, %v153
    %v160 = vshrl.u32 2131351028, %v154
    %v161 = vor.u32 %v159, %v160
    %v162 = vshll.u32 2131351028, %v153
    %v163 = vshrl.u32 2102212464, %v154
    %v164 = vor.u32 %v162, %v163
    %v165 = vshll.u32 2102212464, %v153
    %v166 = vshrl.u32 920167782, %v154
    %v167 = vor.u32 %v165, %v166
    %v168 = vshll.u32 920167782, %v153
    %v169 = vshrl.u32 1326507024, %v154
    %v170 = vor.u32 %v168, %v169
    %vm171 = vcmp.lt.s32.totalorder %v152, 1
    %vm172 = vcmp.lt.s32.totalorder %v152, 2
    %vm173 = vcmp.lt.s32.totalorder %v152, 3
    %vm174 = vcmp.lt.s32.totalorder %v152, 4
    %v175 = vsel %vm171, %v155, %v158
    %v176 = vsel %vm174, %v164, 2102212464
    %v177 = vsel %vm173, %v161, %v176
    %v178 = vsel %vm172, %v175, %v177
    %v179 = vsel %vm171, %v158, %v161
    %v180 = vsel %vm174, %v167, 920167782
    %v181 = vsel %vm173, %v164, %v180
    %v182 = vsel %vm172, %v179, %v181
    %v183 = vsel %vm171, %v161, %v164
    %v184 = vsel %vm174, %v170, 1326507024
    %v185 = vsel %vm173, %v167, %v184
    %v186 = vsel %vm172, %v183, %v185
    %v187 = vshll.u32 %v147, 8
    %v188 = vmul.u32.u64.compose %v187, %v186
    %v189 = vextract.low.u32 %v188
    %v190 = vextract.high.u32 %v188
    %v191 = vmul.u32.u64.compose %v187, %v182
    %v192 = vextract.low.u32 %v191
    %v193 = vextract.high.u32 %v191
    %v194 = vmul.u32 %v187, %v178
    %v195 = vadd.s32 %v190, %v192
    %vm196 = vc.u32 %v190, %v192
    %v197 = vadd.s32 %v193, 1
    %v198 = vsel %vm196, %v197, %v193
    %v199 = vadd.s32 %v194, %v198
    %v200 = vadd.s32 %v199, 536870912
    %v201 = vshrl.u32 %v200, 30
    %v202 = vshll.u32 %v201, 30
    %v203 = vsub.s32 %v199, %v202
    %vm204 = vcmp.lt.s32.totalorder %v203, 0
    %v205 = vsub.s32 0, %v203
    %v206 = vsel %vm204, %v205, %v203
    %v207 = vclz %v206
    %v208 = vsub.s32 %v207, 2
    %vm209 = vcmp.gt.s32.totalorder 0, %v208
    %v210 = vsel %vm209, 0, %v208
    %v211 = vsub.s32 32, %v210
    %v212 = vshll.u32 %v203, %v210
    %v213 = vshrl.u32 %v195, %v211
    %v214 = vor.u32 %v212, %v213
    %v215 = vsub.s32 4294967266, %v210
    %v216 = vadd.s32 %v215, 127
    %v217 = vshll.u32 %v216, 23
    %v218 = vor.u32 4788187, %v217
    %v219 = vand.u32 2147483647, %v218
    %v221 = vcvt.s32.f32 %v214
    %v222 = vmul.f32 %v221, %v219
    %v223 = vxor.u32 %v222, 2147483648
    %v224 = vsel %vm141, %v223, %v222
    %v225 = vsub.s32 4, %v201
    %v226 = vsel %vm141, %v225, %v201
    %v227 = vsel %vm140, %v34, %v224
    %v228 = vsel %vm140, 0, %v226
    %v229 = vcosq.f32.pop %v227
    %v230 = vsinq.f32.pop %v227
    %vm231 = vweird.f32 %v34
    %v232 = vadd.s32 %v228, 3
    %v233 = vand.u32 %v232, 3
    %vm234 = vcmp.lt.s32.totalorder %v233, 2
    %vm235 = vcmp.eq.s32.totalorder %v233, 0
    %v236 = vxor.u32 %v230, 2147483648
    %v237 = vsel %vm235, %v229, %v236
    %vm238 = vcmp.eq.s32.totalorder %v233, 2
    %v239 = vxor.u32 %v229, 2147483648
    %v240 = vsel %vm238, %v239, %v230
    %v241 = vsel %vm234, %v237, %v240
    %v242 = vsel %vm231, nan, %v241
    %243 = vxpose.xlu0.b32.start [1/16] %v138, 128
    %244 = vxpose.xlu0.b32.cont [2/16] %v242, 128
    %245 = vxpose.xlu0.b32.cont [3/16] 0.0, 128
    %246 = vxpose.xlu0.b32.cont [4/16] 0.0, 128
    %247 = vxpose.xlu0.b32.cont [5/16] 0.0, 128
    %248 = vxpose.xlu0.b32.cont [6/16] 0.0, 128
    %249 = vxpose.xlu0.b32.cont [7/16] 0.0, 128
    %250 = vxpose.xlu0.b32.cont [8/16] 0.0, 128
    %251 = vxpose.xlu0.b32.cont [9/16] 0.0, 128
    %252 = vxpose.xlu0.b32.cont [10/16] 0.0, 128
    %253 = vxpose.xlu0.b32.cont [11/16] 0.0, 128
    %254 = vxpose.xlu0.b32.cont [12/16] 0.0, 128
    %255 = vxpose.xlu0.b32.cont [13/16] 0.0, 128
    %256 = vxpose.xlu0.b32.cont [14/16] 0.0, 128
    %257 = vxpose.xlu0.b32.cont [15/16] 0.0, 128
    %258 = vxpose.xlu0.b32.end [16/16] 0.0, 128
    %v259 = vpop.trf.xlu0
    %v260 = vpop.trf.xlu0
    %v261 = vpop.trf.xlu0
    %v262 = vpop.trf.xlu0
    %v263 = vpop.trf.xlu0
    %v264 = vpop.trf.xlu0
    %v265 = vpop.trf.xlu0
    %v266 = vpop.trf.xlu0
    %v267 = vpop.trf.xlu0
    %v268 = vpop.trf.xlu0
    %v269 = vpop.trf.xlu0
    %v270 = vpop.trf.xlu0
    %v271 = vpop.trf.xlu0
    %v272 = vpop.trf.xlu0
    %v273 = vpop.trf.xlu0
    %v274 = vpop.trf.xlu0
    %vm275 = vcmask 130048
    %276 = vst.msk [vmem:[#allocation2] sm:$0xff] %vm275, %v259
    %277 = vst.msk [vmem:[#allocation2 + $0x8] sm:$0xff] %vm275, %v260
    %278 = vst.msk [vmem:[#allocation2 + $0x10] sm:$0xff] %vm275, %v261
    %279 = vst.msk [vmem:[#allocation2 + $0x18] sm:$0xff] %vm275, %v262
    %v280 = vand.u32 2147483647, %v33
    %vm281 = vcmp.le.f32.partialorder %v280, 0.7853982
    %vm282 = vcmp.lt.s32.totalorder %v33, 0
    %v283 = vand.u32 %v33, 2139095040
    %v284 = vshrl.u32 %v283, 23
    %v285 = vsub.s32 %v284, 127
    %v286 = vand.u32 2147483647, %v33
    %v287 = vand.u32 %v286, 8388607
    %v288 = vor.u32 %v287, 8388608
    %v289 = vsub.s32 0, %v288
    %v290 = vadd.s32 %v285, 1
    %vm291 = vcmp.gt.s32.totalorder %v290, 0
    %v292 = vsel %vm291, %v290, 0
    %v293 = vshrl.u32 %v292, 5
    %v294 = vand.u32 %v292, 31
    %v295 = vsub.s32 32, %v294
    %v296 = vshrl.u32 683565275, %v295
    %v297 = vshll.u32 683565275, %v294
    %v298 = vshrl.u32 2475754826, %v295
    %v299 = vor.u32 %v297, %v298
    %v300 = vshll.u32 2475754826, %v294
    %v301 = vshrl.u32 2131351028, %v295
    %v302 = vor.u32 %v300, %v301
    %v303 = vshll.u32 2131351028, %v294
    %v304 = vshrl.u32 2102212464, %v295
    %v305 = vor.u32 %v303, %v304
    %v306 = vshll.u32 2102212464, %v294
    %v307 = vshrl.u32 920167782, %v295
    %v308 = vor.u32 %v306, %v307
    %v309 = vshll.u32 920167782, %v294
    %v310 = vshrl.u32 1326507024, %v295
    %v311 = vor.u32 %v309, %v310
    %vm312 = vcmp.lt.s32.totalorder %v293, 1
    %vm313 = vcmp.lt.s32.totalorder %v293, 2
    %vm314 = vcmp.lt.s32.totalorder %v293, 3
    %vm315 = vcmp.lt.s32.totalorder %v293, 4
    %v316 = vsel %vm312, %v296, %v299
    %v317 = vsel %vm315, %v305, 2102212464
    %v318 = vsel %vm314, %v302, %v317
    %v319 = vsel %vm313, %v316, %v318
    %v320 = vsel %vm312, %v299, %v302
    %v321 = vsel %vm315, %v308, 920167782
    %v322 = vsel %vm314, %v305, %v321
    %v323 = vsel %vm313, %v320, %v322
    %v324 = vsel %vm312, %v302, %v305
    %v325 = vsel %vm315, %v311, 1326507024
    %v326 = vsel %vm314, %v308, %v325
    %v327 = vsel %vm313, %v324, %v326
    %v328 = vshll.u32 %v288, 8
    %v329 = vmul.u32.u64.compose %v328, %v327
    %v330 = vextract.low.u32 %v329
    %v331 = vextract.high.u32 %v329
    %v332 = vmul.u32.u64.compose %v328, %v323
    %v333 = vextract.low.u32 %v332
    %v334 = vextract.high.u32 %v332
    %v335 = vmul.u32 %v328, %v319
    %v336 = vadd.s32 %v331, %v333
    %vm337 = vc.u32 %v331, %v333
    %v338 = vadd.s32 %v334, 1
    %v339 = vsel %vm337, %v338, %v334
    %v340 = vadd.s32 %v335, %v339
    %v341 = vadd.s32 %v340, 536870912
    %v342 = vshrl.u32 %v341, 30
    %v343 = vshll.u32 %v342, 30
    %v344 = vsub.s32 %v340, %v343
    %vm345 = vcmp.lt.s32.totalorder %v344, 0
    %v346 = vsub.s32 0, %v344
    %v347 = vsel %vm345, %v346, %v344
    %v348 = vclz %v347
    %v349 = vsub.s32 %v348, 2
    %vm350 = vcmp.gt.s32.totalorder 0, %v349
    %v351 = vsel %vm350, 0, %v349
    %v352 = vsub.s32 32, %v351
    %v353 = vshll.u32 %v344, %v351
    %v354 = vshrl.u32 %v336, %v352
    %v355 = vor.u32 %v353, %v354
    %v356 = vsub.s32 4294967266, %v351
    %v357 = vadd.s32 %v356, 127
    %v358 = vshll.u32 %v357, 23
    %v359 = vor.u32 4788187, %v358
    %v360 = vand.u32 2147483647, %v359
    %v362 = vcvt.s32.f32 %v355
    %v363 = vmul.f32 %v362, %v360
    %v364 = vxor.u32 %v363, 2147483648
    %v365 = vsel %vm282, %v364, %v363
    %v366 = vsub.s32 4, %v342
    %v367 = vsel %vm282, %v366, %v342
    %v368 = vsel %vm281, %v33, %v365
    %v369 = vsel %vm281, 0, %v367
    %v370 = vcosq.f32.pop %v368
    %v371 = vsinq.f32.pop %v368
    %vm372 = vweird.f32 %v33
    %v373 = vand.u32 %v369, 3
    %vm374 = vcmp.lt.s32.totalorder %v373, 2
    %vm375 = vcmp.eq.s32.totalorder %v373, 0
    %v376 = vxor.u32 %v371, 2147483648
    %v377 = vsel %vm375, %v370, %v376
    %vm378 = vcmp.eq.s32.totalorder %v373, 2
    %v379 = vxor.u32 %v370, 2147483648
    %v380 = vsel %vm378, %v379, %v371
    %v381 = vsel %vm374, %v377, %v380
    %v382 = vsel %vm372, nan, %v381
    %v383 = vand.u32 2147483647, %v34
    %vm384 = vcmp.le.f32.partialorder %v383, 0.7853982
    %vm385 = vcmp.lt.s32.totalorder %v34, 0
    %v386 = vand.u32 %v34, 2139095040
    %v387 = vshrl.u32 %v386, 23
    %v388 = vsub.s32 %v387, 127
    %v389 = vand.u32 2147483647, %v34
    %v390 = vand.u32 %v389, 8388607
    %v391 = vor.u32 %v390, 8388608
    %v392 = vsub.s32 0, %v391
    %v393 = vadd.s32 %v388, 1
    %vm394 = vcmp.gt.s32.totalorder %v393, 0
    %v395 = vsel %vm394, %v393, 0
    %v396 = vshrl.u32 %v395, 5
    %v397 = vand.u32 %v395, 31
    %v398 = vsub.s32 32, %v397
    %v399 = vshrl.u32 683565275, %v398
    %v400 = vshll.u32 683565275, %v397
    %v401 = vshrl.u32 2475754826, %v398
    %v402 = vor.u32 %v400, %v401
    %v403 = vshll.u32 2475754826, %v397
    %v404 = vshrl.u32 2131351028, %v398
    %v405 = vor.u32 %v403, %v404
    %v406 = vshll.u32 2131351028, %v397
    %v407 = vshrl.u32 2102212464, %v398
    %v408 = vor.u32 %v406, %v407
    %v409 = vshll.u32 2102212464, %v397
    %v410 = vshrl.u32 920167782, %v398
    %v411 = vor.u32 %v409, %v410
    %v412 = vshll.u32 920167782, %v397
    %v413 = vshrl.u32 1326507024, %v398
    %v414 = vor.u32 %v412, %v413
    %vm415 = vcmp.lt.s32.totalorder %v396, 1
    %vm416 = vcmp.lt.s32.totalorder %v396, 2
    %vm417 = vcmp.lt.s32.totalorder %v396, 3
    %vm418 = vcmp.lt.s32.totalorder %v396, 4
    %v419 = vsel %vm415, %v399, %v402
    %v420 = vsel %vm418, %v408, 2102212464
    %v421 = vsel %vm417, %v405, %v420
    %v422 = vsel %vm416, %v419, %v421
    %v423 = vsel %vm415, %v402, %v405
    %v424 = vsel %vm418, %v411, 920167782
    %v425 = vsel %vm417, %v408, %v424
    %v426 = vsel %vm416, %v423, %v425
    %v427 = vsel %vm415, %v405, %v408
    %v428 = vsel %vm418, %v414, 1326507024
    %v429 = vsel %vm417, %v411, %v428
    %v430 = vsel %vm416, %v427, %v429
    %v431 = vshll.u32 %v391, 8
    %v432 = vmul.u32.u64.compose %v431, %v430
    %v433 = vextract.low.u32 %v432
    %v434 = vextract.high.u32 %v432
    %v435 = vmul.u32.u64.compose %v431, %v426
    %v436 = vextract.low.u32 %v435
    %v437 = vextract.high.u32 %v435
    %v438 = vmul.u32 %v431, %v422
    %v439 = vadd.s32 %v434, %v436
    %vm440 = vc.u32 %v434, %v436
    %v441 = vadd.s32 %v437, 1
    %v442 = vsel %vm440, %v441, %v437
    %v443 = vadd.s32 %v438, %v442
    %v444 = vadd.s32 %v443, 536870912
    %v445 = vshrl.u32 %v444, 30
    %v446 = vshll.u32 %v445, 30
    %v447 = vsub.s32 %v443, %v446
    %vm448 = vcmp.lt.s32.totalorder %v447, 0
    %v449 = vsub.s32 0, %v447
    %v450 = vsel %vm448, %v449, %v447
    %v451 = vclz %v450
    %v452 = vsub.s32 %v451, 2
    %vm453 = vcmp.gt.s32.totalorder 0, %v452
    %v454 = vsel %vm453, 0, %v452
    %v455 = vsub.s32 32, %v454
    %v456 = vshll.u32 %v447, %v454
    %v457 = vshrl.u32 %v439, %v455
    %v458 = vor.u32 %v456, %v457
    %v459 = vsub.s32 4294967266, %v454
    %v460 = vadd.s32 %v459, 127
    %v461 = vshll.u32 %v460, 23
    %v462 = vor.u32 4788187, %v461
    %v463 = vand.u32 2147483647, %v462
    %v465 = vcvt.s32.f32 %v458
    %v466 = vmul.f32 %v465, %v463
    %v467 = vxor.u32 %v466, 2147483648
    %v468 = vsel %vm385, %v467, %v466
    %v469 = vsub.s32 4, %v445
    %v470 = vsel %vm385, %v469, %v445
    %v471 = vsel %vm384, %v34, %v468
    %v472 = vsel %vm384, 0, %v470
    %v473 = vcosq.f32.pop %v471
    %v474 = vsinq.f32.pop %v471
    %vm475 = vweird.f32 %v34
    %v476 = vand.u32 %v472, 3
    %vm477 = vcmp.lt.s32.totalorder %v476, 2
    %vm478 = vcmp.eq.s32.totalorder %v476, 0
    %v479 = vxor.u32 %v474, 2147483648
    %v480 = vsel %vm478, %v473, %v479
    %vm481 = vcmp.eq.s32.totalorder %v476, 2
    %v482 = vxor.u32 %v473, 2147483648
    %v483 = vsel %vm481, %v482, %v474
    %v484 = vsel %vm477, %v480, %v483
    %v485 = vsel %vm475, nan, %v484
    %486 = vxpose.xlu0.b32.start [1/16] %v382, 128
    %487 = vxpose.xlu0.b32.cont [2/16] %v485, 128
    %488 = vxpose.xlu0.b32.cont [3/16] 0.0, 128
    %489 = vxpose.xlu0.b32.cont [4/16] 0.0, 128
    %490 = vxpose.xlu0.b32.cont [5/16] 0.0, 128
    %491 = vxpose.xlu0.b32.cont [6/16] 0.0, 128
    %492 = vxpose.xlu0.b32.cont [7/16] 0.0, 128
    %493 = vxpose.xlu0.b32.cont [8/16] 0.0, 128
    %494 = vxpose.xlu0.b32.cont [9/16] 0.0, 128
    %495 = vxpose.xlu0.b32.cont [10/16] 0.0, 128
    %496 = vxpose.xlu0.b32.cont [11/16] 0.0, 128
    %497 = vxpose.xlu0.b32.cont [12/16] 0.0, 128
    %498 = vxpose.xlu0.b32.cont [13/16] 0.0, 128
    %499 = vxpose.xlu0.b32.cont [14/16] 0.0, 128
    %500 = vxpose.xlu0.b32.cont [15/16] 0.0, 128
    %501 = vxpose.xlu0.b32.end [16/16] 0.0, 128
    %v502 = vpop.trf.xlu0
    %v503 = vpop.trf.xlu0
    %v504 = vpop.trf.xlu0
    %v505 = vpop.trf.xlu0
    %v506 = vpop.trf.xlu0
    %v507 = vpop.trf.xlu0
    %v508 = vpop.trf.xlu0
    %v509 = vpop.trf.xlu0
    %v510 = vpop.trf.xlu0
    %v511 = vpop.trf.xlu0
    %v512 = vpop.trf.xlu0
    %v513 = vpop.trf.xlu0
    %v514 = vpop.trf.xlu0
    %v515 = vpop.trf.xlu0
    %v516 = vpop.trf.xlu0
    %v517 = vpop.trf.xlu0
    %522 = vrot.lane.b32.xlu0 %v502, 16
    %v523 = vpop.permute.xlu0 %522
    %524 = vrot.lane.b32.xlu0 %v503, 16
    %v525 = vpop.permute.xlu0 %524
    %526 = vrot.lane.b32.xlu0 %v504, 16
    %v527 = vpop.permute.xlu0 %526
    %528 = vrot.lane.b32.xlu0 %v505, 16
    %v529 = vpop.permute.xlu0 %528
    %vm534 = vcmask 261248
    %535 = vst.msk [vmem:[#allocation2] sm:$0xff] %vm534, %v523
    %536 = vst.msk [vmem:[#allocation2 + $0x8] sm:$0xff] %vm534, %v525
    %537 = vst.msk [vmem:[#allocation2 + $0x10] sm:$0xff] %vm534, %v527
    %538 = vst.msk [vmem:[#allocation2 + $0x18] sm:$0xff] %vm534, %v529
    // Predicated region
    $region10: #{tpu_custom_call.1} parent=1 // pred_check
      _
    $region11: #{tpu_custom_call.1} parent=1 // pred_check_branch
      %540 = sbr.rel (0) target = $region13
    $region12: #{tpu_custom_call.1} parent=1 // pred_region
      %s542 = ssub.s32 512, 512
      %543 = vsyncadd [#allocation3], %s542
      %s544 = sshll.u32 [#allocation2], 4
      %s545 = int_to_ptr.vmem [resolvable:$true] %s544
      %550 = dma.vmem_to_hbm [thread:$0]  %s545, 512, %s2, [#allocation3], 128, 128, 8
    $region13: #{tpu_custom_call.1} parent=1 // pred_fallthru
      _
    // Predicated region
    $region14: #{tpu_custom_call.1} parent=1 // pred_check
      _
    $region15: #{tpu_custom_call.1} parent=1 // pred_check_branch
      %552 = sbr.rel (0) target = $region17
    $region16: #{tpu_custom_call.1} parent=1 // pred_region
      %553 = dma.done [#allocation3], 512
    $region17: #{tpu_custom_call.1} parent=1 // pred_fallthru
      _
    %554 = vsyncpa [#allocation3], 1

</llo_original>
